<compile_context>
chip_gen: v5e
topology: v5e:2x2
jax: 0.10.0
libtpu: 0.0.40
codegen_flags: <defaults>
</compile_context>

<pallas_src>
import jax
import jax.numpy as jnp
from jax.experimental import pallas as pl
from jax.experimental.pallas import tpu as pltpu


# ------------------------- hyperparameters (default_args) -------------------
class Args:
    action_size = 8
    encode_action_size = 16
    pvrnn_mtrnn_size = 32
    hidden_size = 32


default_args = Args()

TM_MAX = 2048  # row-tile cap; (TM, 40) bf16 double-buffered stays << VMEM


def _round_up(x, m):
    return ((x + m - 1) // m) * m


# ------------------------------ Pallas kernel --------------------------------
def make_critic_kernel(args):
    """Builds the kernel + returns the packed-weight-slab row count."""
    A = args.action_size
    E = args.encode_action_size
    P = args.pvrnn_mtrnn_size
    H = args.hidden_size

    # Row layout of the packed f32 weight slab (all segments are H lanes wide,
    # zero-padded where the true width/height is smaller).
    r_wact0, r_wact1 = 0, A                       # w_act      (A, H)  first E cols real
    r_w1fh0, r_w1fh1 = r_wact1, r_wact1 + P       # w1[:P]     (P, H)
    r_w1a0, r_w1a1 = r_w1fh1, r_w1fh1 + H         # w1[P:]     (H, H)  first E rows real
    r_w20, r_w21 = r_w1a1, r_w1a1 + H             # w2         (H, H)
    r_bact = r_w21                                # b_act      (1, H)  first E cols real
    r_b1 = r_bact + 1                             # b1         (1, H)
    r_b2 = r_b1 + 1                               # b2         (1, H)
    r_w3 = r_b2 + 1                               # w3^T       (1, H)
    n_rows = r_w3 + 1

    def kernel(fh_ref, act_ref, w_ref, scal_ref, out_ref):
        fh = fh_ref[...]                                        # (TM, P) bf16
        act = act_ref[...]                                      # (TM, A) bf16

        # SMEM scalars (scalar path, no vector loads)
        a_act = scal_ref[0]
        a1 = scal_ref[1]
        a2 = scal_ref[2]
        b3 = scal_ref[3]

        # Weight slices (f32 slab, cast to bf16 for the MXU). Static slices.
        w_act = w_ref[r_wact0:r_wact1, :].astype(jnp.bfloat16)  # (A, H)
        w1_fh = w_ref[r_w1fh0:r_w1fh1, :].astype(jnp.bfloat16)  # (P, H)
        w1_act = w_ref[r_w1a0:r_w1a1, :].astype(jnp.bfloat16)   # (H, H)
        w2 = w_ref[r_w20:r_w21, :].astype(jnp.bfloat16)         # (H, H)
        b_act = w_ref[r_bact:r_bact + 1, :]                     # (1, H) f32
        b1 = w_ref[r_b1:r_b1 + 1, :]                            # (1, H) f32
        b2 = w_ref[r_b2:r_b2 + 1, :]                            # (1, H) f32
        w3_row = w_ref[r_w3:r_w3 + 1, :]                        # (1, H) f32

        # Action_IN: Linear + PReLU  (padded lanes E..H-1 stay exactly 0)
        enc = jnp.dot(act, w_act, preferred_element_type=jnp.float32) + b_act
        enc = jnp.where(enc > 0, enc, a_act * enc)

        # x = cat([forward_hidden, enc]) -> Linear + PReLU (split matmul)
        h = (
            jnp.dot(fh, w1_fh, preferred_element_type=jnp.float32)
            + jnp.dot(enc.astype(jnp.bfloat16), w1_act,
                      preferred_element_type=jnp.float32)
            + b1
        )
        h = jnp.where(h > 0, h, a1 * h)

        # value head: Linear + PReLU
        v = jnp.dot(h.astype(jnp.bfloat16), w2,
                    preferred_element_type=jnp.float32) + b2
        v = jnp.where(v > 0, v, a2 * v)

        # final Linear(H -> 1): VPU multiply + lane reduction (no 1-col MXU pass)
        out_ref[...] = (jnp.sum(v * w3_row, axis=-1, keepdims=True)
                        + b3).astype(out_ref.dtype)

    return kernel, n_rows


# ------------------------------ parameter init -------------------------------
def init_params(args, key):
    A, E, P, H = (args.action_size, args.encode_action_size,
                  args.pvrnn_mtrnn_size, args.hidden_size)
    ks = jax.random.split(key, 4)

    def lin(k, fan_in, fan_out):
        # deterministic small-scale init (synthetic weights, not a checkpoint)
        bound = 1.0 / jnp.sqrt(jnp.float32(fan_in))
        kw, kb = jax.random.split(k)
        w = jax.random.uniform(kw, (fan_in, fan_out), jnp.float32, -bound, bound)
        b = jax.random.uniform(kb, (fan_out,), jnp.float32, -bound, bound)
        return w, b

    w_act, b_act = lin(ks[0], A, E)        # Action_IN: A -> E
    w1, b1 = lin(ks[1], P + E, H)          # self.lin
    w2, b2 = lin(ks[2], H, H)              # value[0]
    w3, b3 = lin(ks[3], H, 1)              # value[2]

    # ---- pack everything into one f32 slab (H lanes wide, zero padded) ----
    def padc(x):
        return jnp.pad(x, ((0, 0), (0, H - x.shape[1])))

    slab = jnp.concatenate(
        [
            padc(w_act),                               # (A, H)
            w1[:P],                                    # (P, H)
            jnp.pad(w1[P:], ((0, H - E), (0, 0))),     # (H, H)
            w2,                                        # (H, H)
            padc(b_act[None, :]),                      # (1, H)
            b1[None, :],                               # (1, H)
            b2[None, :],                               # (1, H)
            w3.T,                                      # (1, H)
        ],
        axis=0,
    )
    pad_rows = (-slab.shape[0]) % 8                    # f32 sublane tile = 8
    if pad_rows:
        slab = jnp.pad(slab, ((0, pad_rows), (0, 0)))

    # PReLU alphas (PyTorch default 0.25) + final bias -> SMEM scalar array
    scalars = jnp.concatenate(
        [jnp.full((3,), 0.25, jnp.float32), b3.astype(jnp.float32)]
    )

    return {
        "w_slab": slab.astype(jnp.float32),
        "scalars": scalars,
        # f32 originals kept for the pure-JAX reference check
        "ref": {"w_act": w_act, "b_act": b_act, "w1": w1, "b1": b1,
                "w2": w2, "b2": b2, "w3": w3, "b3": b3},
    }


# --------------------------------- wrapper ------------------------------------
def critic_forward(params, rgbd, comm_in, action, comm_out,
                   forward_hidden, critic_hidden, args=default_args):
    # rgbd, comm_in, comm_out, critic_hidden are unused by Critic.forward
    del rgbd, comm_in, comm_out, critic_hidden

    if action.ndim == 2:
        action = action[:, None, :]
    if forward_hidden.ndim == 2:
        forward_hidden = forward_hidden[:, None, :]

    B, S, FH = forward_hidden.shape
    A = action.shape[-1]
    M = B * S

    # Row tile: multiple of 16 (bf16 sublanes), capped; pad M so TM | M_pad.
    TM = min(TM_MAX, _round_up(M, 16))
    M_pad = _round_up(M, TM)

    fh2 = forward_hidden.reshape(M, FH).astype(jnp.bfloat16)
    act2 = action.reshape(M, A).astype(jnp.bfloat16)
    if M_pad != M:
        fh2 = jnp.pad(fh2, ((0, M_pad - M), (0, 0)))
        act2 = jnp.pad(act2, ((0, M_pad - M), (0, 0)))

    kernel, n_slab_rows = make_critic_kernel(args)
    w_slab = params["w_slab"]
    assert w_slab.shape[0] >= n_slab_rows

    grid = (M_pad // TM,)
    out = pl.pallas_call(
        kernel,
        out_shape=jax.ShapeDtypeStruct((M_pad, 1), jnp.float32),
        grid=grid,
        in_specs=[
            pl.BlockSpec((TM, FH), lambda i: (i, 0)),            # fh tiles
            pl.BlockSpec((TM, A), lambda i: (i, 0)),             # action tiles
            pl.BlockSpec(w_slab.shape, lambda i: (0, 0)),        # weights: resident
            pl.BlockSpec(memory_space=pltpu.MemorySpace.SMEM),   # scalars
        ],
        out_specs=pl.BlockSpec((TM, 1), lambda i: (i, 0)),
        compiler_params=pltpu.CompilerParams(
            dimension_semantics=("parallel",)),                  # v7x: 2 TCs
    )(fh2, act2, w_slab, params["scalars"])

    value = out[:M].reshape(B, S, 1)
    return value, None


# ------------------------- pure-JAX reference (f32) ---------------------------
def critic_reference(rp, action, forward_hidden):
    if action.ndim == 2:
        action = action[:, None, :]
    if forward_hidden.ndim == 2:
        forward_hidden = forward_hidden[:, None, :]

    def prelu(x, a):
        return jnp.where(x > 0, x, a * x)

    enc = prelu(action @ rp["w_act"] + rp["b_act"], 0.25)
    x = jnp.concatenate([forward_hidden, enc], axis=-1)
    h = prelu(x @ rp["w1"] + rp["b1"], 0.25)
    v = prelu(h @ rp["w2"] + rp["b2"], 0.25)
    return v @ rp["w3"] + rp["b3"]


# ----------------------------------- main -------------------------------------
if __name__ == "__main__":
    args = default_args
    key = jax.random.PRNGKey(0)
    k_params, k_fh, k_act, k_rgbd, k_ci, k_co, k_ch = jax.random.split(key, 7)

    params = init_params(args, k_params)

    B, S = 2, 1
    # unused-by-forward inputs (kept for signature fidelity)
    rgbd = jax.random.normal(k_rgbd, (B, 4, 16, 16), jnp.float32)      # NCHW
    comm_in = jax.random.normal(k_ci, (B, 8), jnp.float32)
    comm_out = jax.random.normal(k_co, (B, 8), jnp.float32)
    critic_hidden = jax.random.normal(k_ch, (B, args.hidden_size), jnp.float32)

    # used inputs: 2-D so the forward's unsqueeze(1) path is exercised
    forward_hidden = jax.random.normal(k_fh, (B, args.pvrnn_mtrnn_size), jnp.float32)
    action = jax.random.normal(k_act, (B, args.action_size), jnp.float32)

    value, extra = critic_forward(
        params, rgbd, comm_in, action, comm_out, forward_hidden, critic_hidden, args
    )
    value = jax.block_until_ready(value)
    assert value.shape == (B, 1, 1)
    assert extra is None

    # numerical parity vs pure-JAX f32 reference (loose tol for bf16 streams)
    ref = critic_reference(params["ref"], action, forward_hidden)
    assert jnp.allclose(value, ref, rtol=5e-2, atol=5e-2), (value, ref)

    print("KERNEL_OK")
</pallas_src>

<mosaic_0001>
module attributes {stable_mosaic.version = 11 : i64} {
  func.func @kernel(%arg0: i32, %arg1: memref<16x32xbf16, #tpu.memory_space<vmem>>, %arg2: memref<16x8xbf16, #tpu.memory_space<vmem>>, %arg3: memref<112x32xf32, #tpu.memory_space<vmem>>, %arg4: memref<4xf32, #tpu.memory_space<smem>>, %arg5: memref<16x1xf32, #tpu.memory_space<vmem>>) attributes {dimension_semantics = [#tpu.dimension_semantics<parallel>], iteration_bounds = array<i64: 1>, scalar_prefetch = 0 : i64, scratch_operands = 0 : i64, tpu.core_type = #tpu.core_type<tc>, window_params = [{transform_indices = @transform_0, window_bounds = array<i64: 16, 32>}, {transform_indices = @transform_1, window_bounds = array<i64: 16, 8>}, {pipeline_mode = #tpu.pipeline_mode<synchronous>, transform_indices = @transform_2, window_bounds = array<i64: 112, 32>}, {transform_indices = @transform_3, window_bounds = array<i64: 4>}, {transform_indices = @transform_4, window_bounds = array<i64: 16, 1>}]} {
    %c0 = arith.constant 0 : index
    %c0_0 = arith.constant 0 : index
    %0 = vector.load %arg1[%c0, %c0_0] : memref<16x32xbf16, #tpu.memory_space<vmem>>, vector<16x32xbf16>
    %c0_1 = arith.constant 0 : index
    %c0_2 = arith.constant 0 : index
    %1 = vector.load %arg2[%c0_1, %c0_2] : memref<16x8xbf16, #tpu.memory_space<vmem>>, vector<16x8xbf16>
    %c0_3 = arith.constant 0 : index
    %2 = memref.load %arg4[%c0_3] : memref<4xf32, #tpu.memory_space<smem>>
    %c1 = arith.constant 1 : index
    %3 = memref.load %arg4[%c1] : memref<4xf32, #tpu.memory_space<smem>>
    %c2 = arith.constant 2 : index
    %4 = memref.load %arg4[%c2] : memref<4xf32, #tpu.memory_space<smem>>
    %c3 = arith.constant 3 : index
    %5 = memref.load %arg4[%c3] : memref<4xf32, #tpu.memory_space<smem>>
    %c0_4 = arith.constant 0 : index
    %c0_5 = arith.constant 0 : index
    %6 = vector.load %arg3[%c0_4, %c0_5] : memref<112x32xf32, #tpu.memory_space<vmem>>, vector<8x32xf32>
    %7 = arith.truncf %6 : vector<8x32xf32> to vector<8x32xbf16>
    %c8 = arith.constant 8 : index
    %c0_6 = arith.constant 0 : index
    %8 = vector.load %arg3[%c8, %c0_6] : memref<112x32xf32, #tpu.memory_space<vmem>>, vector<32x32xf32>
    %9 = arith.truncf %8 : vector<32x32xf32> to vector<32x32xbf16>
    %c40 = arith.constant 40 : index
    %c0_7 = arith.constant 0 : index
    %10 = vector.load %arg3[%c40, %c0_7] : memref<112x32xf32, #tpu.memory_space<vmem>>, vector<32x32xf32>
    %11 = arith.truncf %10 : vector<32x32xf32> to vector<32x32xbf16>
    %c72 = arith.constant 72 : index
    %c0_8 = arith.constant 0 : index
    %12 = vector.load %arg3[%c72, %c0_8] : memref<112x32xf32, #tpu.memory_space<vmem>>, vector<32x32xf32>
    %13 = arith.truncf %12 : vector<32x32xf32> to vector<32x32xbf16>
    %c104 = arith.constant 104 : index
    %c0_9 = arith.constant 0 : index
    %14 = vector.load %arg3[%c104, %c0_9] : memref<112x32xf32, #tpu.memory_space<vmem>>, vector<1x32xf32>
    %c105 = arith.constant 105 : index
    %c0_10 = arith.constant 0 : index
    %15 = vector.load %arg3[%c105, %c0_10] : memref<112x32xf32, #tpu.memory_space<vmem>>, vector<1x32xf32>
    %c106 = arith.constant 106 : index
    %c0_11 = arith.constant 0 : index
    %16 = vector.load %arg3[%c106, %c0_11] : memref<112x32xf32, #tpu.memory_space<vmem>>, vector<1x32xf32>
    %c107 = arith.constant 107 : index
    %c0_12 = arith.constant 0 : index
    %17 = vector.load %arg3[%c107, %c0_12] : memref<112x32xf32, #tpu.memory_space<vmem>>, vector<1x32xf32>
    %cst = arith.constant dense<0.000000e+00> : vector<16x32xf32>
    %18 = tpu.matmul %1, %7, %cst {dimension_numbers = #tpu.dot_dimension_numbers<[1], [0], [0], [1], [0, 0, 1, 1], [], []>} : vector<16x8xbf16>, vector<8x32xbf16>, vector<16x32xf32> -> vector<16x32xf32>
    %19 = vector.broadcast %14 : vector<1x32xf32> to vector<16x32xf32>
    %20 = arith.addf %18, %19 : vector<16x32xf32>
    %cst_13 = arith.constant 0.000000e+00 : f32
    %21 = vector.broadcast %cst_13 : f32 to vector<16x32xf32>
    %22 = arith.cmpf ogt, %20, %21 : vector<16x32xf32>
    %23 = vector.broadcast %2 : f32 to vector<16x32xf32>
    %24 = arith.mulf %23, %20 : vector<16x32xf32>
    %25 = arith.select %22, %20, %24 : vector<16x32xi1>, vector<16x32xf32>
    %cst_14 = arith.constant dense<0.000000e+00> : vector<16x32xf32>
    %26 = tpu.matmul %0, %9, %cst_14 {dimension_numbers = #tpu.dot_dimension_numbers<[1], [0], [0], [1], [0, 0, 1, 1], [], []>} : vector<16x32xbf16>, vector<32x32xbf16>, vector<16x32xf32> -> vector<16x32xf32>
    %27 = arith.truncf %25 : vector<16x32xf32> to vector<16x32xbf16>
    %cst_15 = arith.constant dense<0.000000e+00> : vector<16x32xf32>
    %28 = tpu.matmul %27, %11, %cst_15 {dimension_numbers = #tpu.dot_dimension_numbers<[1], [0], [0], [1], [0, 0, 1, 1], [], []>} : vector<16x32xbf16>, vector<32x32xbf16>, vector<16x32xf32> -> vector<16x32xf32>
    %29 = arith.addf %26, %28 : vector<16x32xf32>
    %30 = vector.broadcast %15 : vector<1x32xf32> to vector<16x32xf32>
    %31 = arith.addf %29, %30 : vector<16x32xf32>
    %cst_16 = arith.constant 0.000000e+00 : f32
    %32 = vector.broadcast %cst_16 : f32 to vector<16x32xf32>
    %33 = arith.cmpf ogt, %31, %32 : vector<16x32xf32>
    %34 = vector.broadcast %3 : f32 to vector<16x32xf32>
    %35 = arith.mulf %34, %31 : vector<16x32xf32>
    %36 = arith.select %33, %31, %35 : vector<16x32xi1>, vector<16x32xf32>
    %37 = arith.truncf %36 : vector<16x32xf32> to vector<16x32xbf16>
    %cst_17 = arith.constant dense<0.000000e+00> : vector<16x32xf32>
    %38 = tpu.matmul %37, %13, %cst_17 {dimension_numbers = #tpu.dot_dimension_numbers<[1], [0], [0], [1], [0, 0, 1, 1], [], []>} : vector<16x32xbf16>, vector<32x32xbf16>, vector<16x32xf32> -> vector<16x32xf32>
    %39 = vector.broadcast %16 : vector<1x32xf32> to vector<16x32xf32>
    %40 = arith.addf %38, %39 : vector<16x32xf32>
    %cst_18 = arith.constant 0.000000e+00 : f32
    %41 = vector.broadcast %cst_18 : f32 to vector<16x32xf32>
    %42 = arith.cmpf ogt, %40, %41 : vector<16x32xf32>
    %43 = vector.broadcast %4 : f32 to vector<16x32xf32>
    %44 = arith.mulf %43, %40 : vector<16x32xf32>
    %45 = arith.select %42, %40, %44 : vector<16x32xi1>, vector<16x32xf32>
    %46 = vector.broadcast %17 : vector<1x32xf32> to vector<16x32xf32>
    %47 = arith.mulf %45, %46 : vector<16x32xf32>
    %cst_19 = arith.constant dense<0.000000e+00> : vector<16xf32>
    %48 = vector.multi_reduction <add>, %47, %cst_19 [1] : vector<16x32xf32> to vector<16xf32>
    %49 = vector.shape_cast %48 : vector<16xf32> to vector<16x1xf32>
    %50 = vector.broadcast %5 : f32 to vector<16x1xf32>
    %51 = arith.addf %49, %50 : vector<16x1xf32>
    %c0_20 = arith.constant 0 : index
    %c0_21 = arith.constant 0 : index
    %52 = vector.load %arg5[%c0_20, %c0_21] : memref<16x1xf32, #tpu.memory_space<vmem>>, vector<16x1xf32>
    tpu.vector_store %arg5[%c0_20, %c0_21], %51 {strides = array<i32>} : memref<16x1xf32, #tpu.memory_space<vmem>>, vector<16x1xf32>,
    return
  }
  func.func @transform_0(%arg0: i32) -> (i32, i32) {
    %c0_i32 = arith.constant 0 : i32
    %c0_i32_0 = arith.constant 0 : i32
    return %arg0, %c0_i32 : i32, i32
  }
  func.func @transform_1(%arg0: i32) -> (i32, i32) {
    %c0_i32 = arith.constant 0 : i32
    %c0_i32_0 = arith.constant 0 : i32
    return %arg0, %c0_i32 : i32, i32
  }
  func.func @transform_2(%arg0: i32) -> (i32, i32) {
    %c0_i32 = arith.constant 0 : i32
    %c0_i32_0 = arith.constant 0 : i32
    %c0_i32_1 = arith.constant 0 : i32
    return %c0_i32, %c0_i32_0 : i32, i32
  }
  func.func @transform_3(%arg0: i32) -> i32 {
    %c0_i32 = arith.constant 0 : i32
    %c0_i32_0 = arith.constant 0 : i32
    return %c0_i32 : i32
  }
  func.func @transform_4(%arg0: i32) -> (i32, i32) {
    %c0_i32 = arith.constant 0 : i32
    %c0_i32_0 = arith.constant 0 : i32
    return %arg0, %c0_i32 : i32, i32
  }
}

</mosaic_0001>

<llo_original>
// kernel: tpu_custom_call.1
$region0: #{tpu_custom_call.1}
  #allocation0 [shape = 'u32[]', space=smem, size = 0x4, offset = 0x4, fixed_abs, tag = 'smem constant byte address 0x4 - core index']
  #allocation1 [shape = 'u32[72,128]{1,0:T(1,128)}', space=vmem, size = 0x9000, scoped, tag = 'internal scratch']
  %s0 = inlined_call_operand.vmem [shape: bf16[16,32], index: 0, kind: input, shape index: {}]
  %s1 = inlined_call_operand.vmem [shape: bf16[16,8], index: 1, kind: input, shape index: {}]
  %s2 = inlined_call_operand.vmem [shape: f32[112,32], index: 2, kind: input, shape index: {}]
  %s3 = inlined_call_operand.vmem [shape: f32[4], index: 3, kind: input, shape index: {}]
  %s4 = inlined_call_operand.vmem [shape: f32[16,1], index: 4, kind: output, shape index: {}]
  %s5 = sld [smem:[#allocation0]]
  $region30: #{tpu_custom_call.1} parent=0
    _
  %s7 = ssub.s32 1, %s5
  %s8 = scalar_select 0, %s7, %s5
  $region1: #{tpu_custom_call.1} parent=0
    #allocation2 [shape = 'u8[512]{0}', space=smem, size = 0x200, scoped, tag = 'input window, operand 3, single buffered']
    #allocation3 [shape = 's32[1]{0}', space=sflag, size = 0x4, scoped, tag = 'scoped memory for tpu_custom_call.1']
    %9 = vsyncpa [#allocation3], 0
    // Predicated region
    $region2: #{tpu_custom_call.1} parent=1 // pred_check
      _
    $region3: #{tpu_custom_call.1} parent=1 // pred_check_branch
      %11 = sbr.rel (0) target = $region5
    $region4: #{tpu_custom_call.1} parent=1 // pred_region
      _
    $region5: #{tpu_custom_call.1} parent=1 // pred_fallthru
      _
    // Predicated region
    $region6: #{tpu_custom_call.1} parent=1 // pred_check
      _
    $region7: #{tpu_custom_call.1} parent=1 // pred_check_branch
      %13 = sbr.rel (0) target = $region9
    $region8: #{tpu_custom_call.1} parent=1 // pred_region
      _
    $region9: #{tpu_custom_call.1} parent=1 // pred_fallthru
      _
    // Predicated region
    $region10: #{tpu_custom_call.1} parent=1 // pred_check
      _
    $region11: #{tpu_custom_call.1} parent=1 // pred_check_branch
      %15 = sbr.rel (0) target = $region13
    $region12: #{tpu_custom_call.1} parent=1 // pred_region
      _
    $region13: #{tpu_custom_call.1} parent=1 // pred_fallthru
      _
    // Predicated region
    $region14: #{tpu_custom_call.1} parent=1 // pred_check
      _
    $region15: #{tpu_custom_call.1} parent=1 // pred_check_branch
      %17 = sbr.rel (0) target = $region17
    $region16: #{tpu_custom_call.1} parent=1 // pred_region
      %19 = vsyncadd [#allocation3], 0
      %s21 = sshll.u32 %s3, 4
      %s22 = int_to_ptr.vmem [resolvable:$true] %s21
      %24 = dma.vmem_to_smem %s22, 16, [#allocation2], [#allocation3]
    $region17: #{tpu_custom_call.1} parent=1 // pred_fallthru
      _
    // Predicated region
    $region18: #{tpu_custom_call.1} parent=1 // pred_check
      _
    $region19: #{tpu_custom_call.1} parent=1 // pred_check_branch
      %26 = sbr.rel (0) target = $region21
    $region20: #{tpu_custom_call.1} parent=1 // pred_region
      %28 = dma.done [#allocation3], 16
    $region21: #{tpu_custom_call.1} parent=1 // pred_fallthru
      _
    %29 = sfence
    %v31 = vld [vmem:[%s0] sm:$0xf]
    %v32 = vld [vmem:[%s0 + $0x4] sm:$0xf]
    %v33 = vld [vmem:[%s1] sm:$0xf]
    %v34 = vld [vmem:[%s1 + $0x4] sm:$0xf]
    %s35 = sld [smem:[#allocation2]]
    %s36 = sld [smem:[#allocation2 + $0x1]]
    %s37 = sld [smem:[#allocation2 + $0x2]]
    %s38 = sld [smem:[#allocation2 + $0x3]]
    %v39 = vld [vmem:[%s2] sm:$0xff]
    %v40 = vpack.c.bf16 %v39, %v39
    %v41 = vld [vmem:[%s2 + $0x8] sm:$0xff]
    %v42 = vld [vmem:[%s2 + $0x10] sm:$0xff]
    %v43 = vld [vmem:[%s2 + $0x18] sm:$0xff]
    %v44 = vld [vmem:[%s2 + $0x20] sm:$0xff]
    %v45 = vpack.c.bf16 %v42, %v41
    %v46 = vpack.c.bf16 %v44, %v43
    %v47 = vld [vmem:[%s2 + $0x28] sm:$0xff]
    %v48 = vld [vmem:[%s2 + $0x30] sm:$0xff]
    %v49 = vld [vmem:[%s2 + $0x38] sm:$0xff]
    %v50 = vld [vmem:[%s2 + $0x40] sm:$0xff]
    %v51 = vpack.c.bf16 %v48, %v47
    %v52 = vpack.c.bf16 %v50, %v49
    %v53 = vld [vmem:[%s2 + $0x48] sm:$0xff]
    %v54 = vld [vmem:[%s2 + $0x50] sm:$0xff]
    %v55 = vld [vmem:[%s2 + $0x58] sm:$0xff]
    %v56 = vld [vmem:[%s2 + $0x60] sm:$0xff]
    %v57 = vpack.c.bf16 %v54, %v53
    %v58 = vpack.c.bf16 %v56, %v55
    %v59 = vld [vmem:[%s2 + $0x68] sm:$0x1]
    %v60 = vld [vmem:[%s2 + $0x69] sm:$0x1]
    %v61 = vld [vmem:[%s2 + $0x6a] sm:$0x1]
    %v62 = vld [vmem:[%s2 + $0x6b] sm:$0x1]
    %v63 = vperm.slane %v59, 0
    %v66 = vunpack.c.l.b16 %v33
    %v67 = vunpack.c.l.b16 %v34
    %v68 = vpack.c.b16 %v67, %v66
    %vm69 = vcmask 64512
    %v71 = vsel %vm69, %v68, 0
    %vm73 = vcmask 1043456
    %v75 = vsel %vm73, %v40, 0
    %77 = vmatpush.bf16.msra.mxu0 0
    %78 = vmatpush.bf16.msra.mxu0 0
    %79 = vmatpush.bf16.msra.mxu0 0
    %80 = vmatpush.bf16.msra.mxu0 0
    %81 = vmatpush.bf16.msra.mxu0 0
    %82 = vmatpush.bf16.msra.mxu0 0
    %83 = vmatpush.bf16.msra.mxu0 0
    %84 = vmatpush.bf16.msra.mxu0 %v75
    %85 = vmatmul.bf16.gmra.mxu0 %v71
    %v86 = vpop.f32.mrf.mxu0
    %v87 = vadd.f32 %v63, %v86
    %v88 = vpop.f32.mrf.mxu0
    %v89 = vadd.f32 %v63, %v88
    %90 = vdwg.mxu0
    %vm91 = vcmp.gt.f32.partialorder %v87, 0.0
    %vm92 = vcmp.gt.f32.partialorder %v89, 0.0
    %v93 = vstv %s35
    %v94 = vmul.f32 %v93, %v87
    %v95 = vmul.f32 %v93, %v89
    %v96 = vsel %vm91, %v87, %v94
    %v97 = vsel %vm92, %v89, %v95
    %v98 = vpack.c.bf16 %v97, %v96
    %vm99 = vcmask 261120
    %v101 = vsel %vm99, %v98, 0
    %103 = vmatpush.bf16.msra.mxu0 0
    %104 = vmatpush.bf16.msra.mxu0 0
    %105 = vmatpush.bf16.msra.mxu0 0
    %106 = vmatpush.bf16.msra.mxu0 0
    %107 = vmatpush.bf16.msra.mxu0 0
    %108 = vmatpush.bf16.msra.mxu0 0
    %109 = vmatpush.bf16.msra.mxu0 %v52
    %110 = vmatpush.bf16.msra.mxu0 %v51
    %111 = vmatmul.bf16.gmra.mxu0 %v101
    %v112 = vpop.f32.mrf.mxu0
    %v113 = vadd.f32 0.0, %v112
    %v114 = vpop.f32.mrf.mxu0
    %v115 = vadd.f32 0.0, %v114
    %116 = vdwg.mxu0
    %v119 = vunpack.c.l.b16 %v31
    %v120 = vunpack.c.l.b16 %v32
    %v121 = vpack.c.b16 %v120, %v119
    %v123 = vsel %vm99, %v121, 0
    %125 = vmatpush.bf16.msra.mxu0 0
    %126 = vmatpush.bf16.msra.mxu0 0
    %127 = vmatpush.bf16.msra.mxu0 0
    %128 = vmatpush.bf16.msra.mxu0 0
    %129 = vmatpush.bf16.msra.mxu0 0
    %130 = vmatpush.bf16.msra.mxu0 0
    %131 = vmatpush.bf16.msra.mxu0 %v46
    %132 = vmatpush.bf16.msra.mxu0 %v45
    %133 = vmatmul.bf16.gmra.mxu0 %v123
    %v134 = vpop.f32.mrf.mxu0
    %v135 = vadd.f32 %v113, %v134
    %v136 = vpop.f32.mrf.mxu0
    %v137 = vadd.f32 %v115, %v136
    %138 = vdwg.mxu0
    %v139 = vperm.slane %v60, 0
    %v140 = vadd.f32 %v135, %v139
    %v141 = vadd.f32 %v137, %v139
    %vm142 = vcmp.gt.f32.partialorder %v140, 0.0
    %vm143 = vcmp.gt.f32.partialorder %v141, 0.0
    %v144 = vstv %s36
    %v145 = vmul.f32 %v144, %v140
    %v146 = vmul.f32 %v144, %v141
    %v147 = vsel %vm142, %v140, %v145
    %v148 = vsel %vm143, %v141, %v146
    %v149 = vpack.c.bf16 %v148, %v147
    %v150 = vperm.slane %v61, 0
    %v152 = vsel %vm99, %v149, 0
    %154 = vmatpush.bf16.msra.mxu0 0
    %155 = vmatpush.bf16.msra.mxu0 0
    %156 = vmatpush.bf16.msra.mxu0 0
    %157 = vmatpush.bf16.msra.mxu0 0
    %158 = vmatpush.bf16.msra.mxu0 0
    %159 = vmatpush.bf16.msra.mxu0 0
    %160 = vmatpush.bf16.msra.mxu0 %v58
    %161 = vmatpush.bf16.msra.mxu0 %v57
    %162 = vmatmul.bf16.gmra.mxu0 %v152
    %v163 = vpop.f32.mrf.mxu0
    %v164 = vadd.f32 %v150, %v163
    %v165 = vpop.f32.mrf.mxu0
    %v166 = vadd.f32 %v150, %v165
    %167 = vdwg.mxu0
    %vm168 = vcmp.gt.f32.partialorder %v164, 0.0
    %vm169 = vcmp.gt.f32.partialorder %v166, 0.0
    %v170 = vstv %s37
    %v171 = vmul.f32 %v170, %v164
    %v172 = vmul.f32 %v170, %v166
    %v173 = vsel %vm168, %v164, %v171
    %v174 = vsel %vm169, %v166, %v172
    %v175 = vperm.slane %v62, 0
    %v176 = vmul.f32 %v173, %v175
    %v177 = vmul.f32 %v174, %v175
    %v178 = vsel %vm99, %v176, 0.0
    %179 = vadd.xlane.f32.xlu0 %v178
    %v180 = vpop.xlane.xlu0 %179
    %v181 = vsel %vm99, %v177, 0.0
    %182 = vadd.xlane.f32.xlu0 %v181
    %v183 = vpop.xlane.xlu0 %182
    %v184 = vstv %s38
    %v185 = vadd.f32 %v180, %v184
    %v186 = vadd.f32 %v183, %v184
    %vm187 = vcmask 7168
    %188 = vst.msk [vmem:[%s4] sm:$0xff] %vm187, %v185
    %189 = vst.msk [vmem:[%s4 + $0x8] sm:$0xff] %vm187, %v186
    // Predicated region
    $region22: #{tpu_custom_call.1} parent=1 // pred_check
      _
    $region23: #{tpu_custom_call.1} parent=1 // pred_check_branch
      %191 = sbr.rel (0) target = $region25
    $region24: #{tpu_custom_call.1} parent=1 // pred_region
      _
    $region25: #{tpu_custom_call.1} parent=1 // pred_fallthru
      _
    // Predicated region
    $region26: #{tpu_custom_call.1} parent=1 // pred_check
      _
    $region27: #{tpu_custom_call.1} parent=1 // pred_check_branch
      %193 = sbr.rel (0) target = $region29
    $region28: #{tpu_custom_call.1} parent=1 // pred_region
      _
    $region29: #{tpu_custom_call.1} parent=1 // pred_fallthru
      _
    %194 = vsyncpa [#allocation3], 1

</llo_original>
